<compile_context>
chip_gen: v7x
topology: tpu7x:2x2x1
jax: 0.10.0
libtpu: 0.0.40
codegen_flags: <defaults>
</compile_context>

<pallas_src>
import jax
import jax.numpy as jnp
from jax.experimental import pallas as pl
from jax.experimental.pallas import tpu as pltpu


def _round_up(x, m):
    return (x + m - 1) // m * m


# ----------------------------- Pallas kernel ------------------------------- #
def _policy_mlp_kernel(img_ref, st_ref, w_img_ref, w_st_ref, b1_ref,
                       w3_ref, b3_ref, out_ref):
    """Fused 2-layer MLP policy.

    img_ref:   [Bp, Kimg]   f32  flattened image, Kimg a multiple of 256
    st_ref:    [Bp, Kst]    f32  robot_state, columns padded to 128
    w_img_ref: [Kimg, H]    bf16
    w_st_ref:  [Kst, H]     bf16 (rows zero-padded past the real state dim)
    b1_ref:    [1, H]       f32
    w3_ref:    [H, Np]      bf16 (output dim padded to a multiple of 128)
    b3_ref:    [1, Np]      f32
    out_ref:   [Bp, Np]     bf16
    """
    # In-kernel f32 -> bf16 cast of the activations (VPU work hidden under
    # the MXU); both first-layer matmuls accumulate in f32.
    img = img_ref[...].astype(jnp.bfloat16)
    st = st_ref[...].astype(jnp.bfloat16)
    h = jnp.dot(img, w_img_ref[...], preferred_element_type=jnp.float32)
    h = h + jnp.dot(st, w_st_ref[...], preferred_element_type=jnp.float32)
    # Bias + ReLU stay in f32 (v5e has no bf16 VALU).
    h = jnp.maximum(h + b1_ref[...], 0.0)
    # Second layer: cast activations to bf16 only for the MXU operand.
    o = jnp.dot(h.astype(jnp.bfloat16), w3_ref[...],
                preferred_element_type=jnp.float32)
    out_ref[...] = (o + b3_ref[...]).astype(out_ref.dtype)


def policy_network_pallas(image, robot_state, params, seq_len, action_dim):
    """Runs the fused-MLP policy kernel; returns actions [B, T, A] (bf16)."""
    B = image.shape[0]
    # NCHW -> [B, C*H*W] (same row-major ordering as torch .reshape(B, -1)).
    img_flat = image.reshape(B, -1).astype(jnp.float32)
    st = robot_state.astype(jnp.float32)

    k_img_p = params["w_img"].shape[0]   # multiple of 256
    k_st_p = params["w_st"].shape[0]     # multiple of 128
    hidden = params["w_img"].shape[1]
    out_dim_p = params["w3"].shape[1]    # multiple of 128
    out_dim = seq_len * action_dim

    # Pad batch to a multiple of 16: f32 tensors -> whole (8,128) tiles,
    # bf16 MXU operands -> whole (16,128) tiles (no masked sublane pairs).
    Bp = max(16, _round_up(B, 16))
    img_p = jnp.pad(img_flat,
                    ((0, Bp - B), (0, k_img_p - img_flat.shape[1])))
    st_p = jnp.pad(st, ((0, Bp - B), (0, k_st_p - st.shape[1])))

    w_img, w_st, b1, w3, b3 = (params["w_img"], params["w_st"],
                               params["b1"], params["w3"], params["b3"])

    flops = 2 * Bp * (k_img_p * hidden + k_st_p * hidden + hidden * out_dim_p)
    operand_bytes = (img_p.size * 4 + st_p.size * 4
                     + w_img.size * 2 + w_st.size * 2 + w3.size * 2
                     + b1.size * 4 + b3.size * 4)
    out_bytes = Bp * out_dim_p * 2
    bytes_accessed = operand_bytes + out_bytes

    # Whole-array VMEM residency (tiny model); make the scoped VMEM limit
    # explicit so scaled-up weights still fit on v5e/v6e without a K grid.
    vmem_limit = min(64 << 20, max(32 << 20, 2 * bytes_accessed))

    vmem_spec = pl.BlockSpec(memory_space=pltpu.MemorySpace.VMEM)
    out = pl.pallas_call(
        _policy_mlp_kernel,
        out_shape=jax.ShapeDtypeStruct((Bp, out_dim_p), jnp.bfloat16),
        in_specs=[vmem_spec] * 7,
        out_specs=vmem_spec,
        compiler_params=pltpu.CompilerParams(vmem_limit_bytes=vmem_limit),
        cost_estimate=pl.CostEstimate(
            flops=flops, transcendentals=0, bytes_accessed=bytes_accessed),
    )(img_p, st_p, w_img, w_st, b1, w3, b3)

    # Zero-padded batch rows / output columns sliced away here.
    return out[:B, :out_dim].reshape(B, seq_len, action_dim)


# --------------------------- OpenLoopAgent port ----------------------------- #
class OpenLoopAgentPallas:
    """JAX/Pallas port of OpenLoopAgent (caches a full action sequence)."""

    def __init__(self, policy_fn):
        self._pi = policy_fn
        self._t, self._cache = 0, None
        self._steps = None

    def reset(self):
        self._t, self._cache = 0, None
        self._steps = None

    def forward(self, image, robot_state):
        if self._t == 0:
            # .detach() -> stop_gradient (no autograd graph here anyway).
            self._cache = jax.lax.stop_gradient(self._pi(image, robot_state))
            # Split the sequence ONCE into per-step device arrays so later
            # calls are pure Python tuple indexing (no per-step dispatch).
            T = self._cache.shape[1]
            self._steps = tuple(self._cache[:, i] for i in range(T))
        elif self._t >= self._cache.shape[1]:
            raise ValueError
        self._t += 1
        return self._steps[self._t - 1]

    __call__ = forward


# --------------------------------- main ------------------------------------ #
def _init_params(key, din_img, din_st, hidden, out_dim):
    """Weights are padded + cast to bf16 ONCE here; biases stay f32."""
    k1, k2, k3 = jax.random.split(key, 3)
    din_img_p = _round_up(din_img, 256)          # clean K for 2x256 MXUs
    din_st_p = _round_up(max(din_st, 128), 128)  # no ragged 8-wide K tail
    out_dim_p = _round_up(out_dim, 128)          # lane-dense output stores

    w_img = (jax.random.normal(k1, (din_img, hidden), jnp.float32)
             / jnp.sqrt(jnp.float32(din_img)))
    w_st = (jax.random.normal(k2, (din_st, hidden), jnp.float32)
            / jnp.sqrt(jnp.float32(din_st)))
    w3 = (jax.random.normal(k3, (hidden, out_dim), jnp.float32)
          / jnp.sqrt(jnp.float32(hidden)))

    w_img_p = jnp.zeros((din_img_p, hidden), jnp.float32).at[:din_img].set(w_img)
    w_st_p = jnp.zeros((din_st_p, hidden), jnp.float32).at[:din_st].set(w_st)
    w3_p = jnp.zeros((hidden, out_dim_p), jnp.float32).at[:, :out_dim].set(w3)

    return {
        "w_img": w_img_p.astype(jnp.bfloat16),
        "w_st": w_st_p.astype(jnp.bfloat16),
        "b1": jnp.zeros((1, hidden), jnp.float32),
        "w3": w3_p.astype(jnp.bfloat16),
        "b3": jnp.zeros((1, out_dim_p), jnp.float32),
    }


if __name__ == "__main__":
    # Small shapes: batch=2, channels=4, spatial=16x16, state=8,
    # hidden=128, seq=8, action_dim=16.
    B, C, H, W = 2, 4, 16, 16
    STATE_DIM = 8
    HIDDEN = 128
    SEQ_LEN = 8
    ACTION_DIM = 16

    key = jax.random.PRNGKey(0)
    k_img, k_st, k_par = jax.random.split(key, 3)

    image = jax.random.normal(k_img, (B, C, H, W), jnp.float32)       # NCHW
    robot_state = jax.random.normal(k_st, (B, STATE_DIM), jnp.float32)

    params = _init_params(k_par, C * H * W, STATE_DIM, HIDDEN,
                          SEQ_LEN * ACTION_DIM)

    @jax.jit
    def policy_fn(img, st):
        return policy_network_pallas(img, st, params, SEQ_LEN, ACTION_DIM)

    agent = OpenLoopAgentPallas(policy_fn)
    agent.reset()

    # Step 0: runs the Pallas kernel and caches the full sequence.
    a0 = agent(image, robot_state)
    # Step 1: served straight from the host-side per-step tuple (no dispatch).
    a1 = agent(image, robot_state)

    a0 = jax.block_until_ready(a0)
    a1 = jax.block_until_ready(a1)

    assert a0.shape == (B, ACTION_DIM)
    assert a1.shape == (B, ACTION_DIM)
    assert agent._cache.shape == (B, SEQ_LEN, ACTION_DIM)
    assert bool(jnp.all(jnp.isfinite(agent._cache)))

    print("KERNEL_OK")
</pallas_src>

<mosaic_0001>
module attributes {stable_mosaic.version = 11 : i64} {
  func.func @_policy_mlp_kernel(%arg0: memref<16x1024xf32, #tpu.memory_space<vmem>>, %arg1: memref<16x128xf32, #tpu.memory_space<vmem>>, %arg2: memref<1024x128xbf16, #tpu.memory_space<vmem>>, %arg3: memref<128x128xbf16, #tpu.memory_space<vmem>>, %arg4: memref<1x128xf32, #tpu.memory_space<vmem>>, %arg5: memref<128x128xbf16, #tpu.memory_space<vmem>>, %arg6: memref<1x128xf32, #tpu.memory_space<vmem>>, %arg7: memref<16x128xbf16, #tpu.memory_space<vmem>>) attributes {dimension_semantics = [], scalar_prefetch = 0 : i64, scratch_operands = 0 : i64, tpu.core_type = #tpu.core_type<tc>} {
    %c0 = arith.constant 0 : index
    %c0_0 = arith.constant 0 : index
    %0 = vector.load %arg0[%c0, %c0_0] : memref<16x1024xf32, #tpu.memory_space<vmem>>, vector<16x1024xf32>
    %1 = arith.truncf %0 : vector<16x1024xf32> to vector<16x1024xbf16>
    %c0_1 = arith.constant 0 : index
    %c0_2 = arith.constant 0 : index
    %2 = vector.load %arg1[%c0_1, %c0_2] : memref<16x128xf32, #tpu.memory_space<vmem>>, vector<16x128xf32>
    %3 = arith.truncf %2 : vector<16x128xf32> to vector<16x128xbf16>
    %c0_3 = arith.constant 0 : index
    %c0_4 = arith.constant 0 : index
    %4 = vector.load %arg2[%c0_3, %c0_4] : memref<1024x128xbf16, #tpu.memory_space<vmem>>, vector<1024x128xbf16>
    %cst = arith.constant dense<0.000000e+00> : vector<16x128xf32>
    %5 = tpu.matmul %1, %4, %cst {dimension_numbers = #tpu.dot_dimension_numbers<[1], [0], [0], [1], [0, 0, 1, 1], [], []>} : vector<16x1024xbf16>, vector<1024x128xbf16>, vector<16x128xf32> -> vector<16x128xf32>
    %c0_5 = arith.constant 0 : index
    %c0_6 = arith.constant 0 : index
    %6 = vector.load %arg3[%c0_5, %c0_6] : memref<128x128xbf16, #tpu.memory_space<vmem>>, vector<128x128xbf16>
    %cst_7 = arith.constant dense<0.000000e+00> : vector<16x128xf32>
    %7 = tpu.matmul %3, %6, %cst_7 {dimension_numbers = #tpu.dot_dimension_numbers<[1], [0], [0], [1], [0, 0, 1, 1], [], []>} : vector<16x128xbf16>, vector<128x128xbf16>, vector<16x128xf32> -> vector<16x128xf32>
    %8 = arith.addf %5, %7 : vector<16x128xf32>
    %c0_8 = arith.constant 0 : index
    %c0_9 = arith.constant 0 : index
    %9 = vector.load %arg4[%c0_8, %c0_9] : memref<1x128xf32, #tpu.memory_space<vmem>>, vector<1x128xf32>
    %10 = vector.broadcast %9 : vector<1x128xf32> to vector<16x128xf32>
    %11 = arith.addf %8, %10 : vector<16x128xf32>
    %cst_10 = arith.constant 0.000000e+00 : f32
    %12 = vector.broadcast %cst_10 : f32 to vector<16x128xf32>
    %13 = arith.maximumf %11, %12 : vector<16x128xf32>
    %14 = arith.truncf %13 : vector<16x128xf32> to vector<16x128xbf16>
    %c0_11 = arith.constant 0 : index
    %c0_12 = arith.constant 0 : index
    %15 = vector.load %arg5[%c0_11, %c0_12] : memref<128x128xbf16, #tpu.memory_space<vmem>>, vector<128x128xbf16>
    %cst_13 = arith.constant dense<0.000000e+00> : vector<16x128xf32>
    %16 = tpu.matmul %14, %15, %cst_13 {dimension_numbers = #tpu.dot_dimension_numbers<[1], [0], [0], [1], [0, 0, 1, 1], [], []>} : vector<16x128xbf16>, vector<128x128xbf16>, vector<16x128xf32> -> vector<16x128xf32>
    %c0_14 = arith.constant 0 : index
    %c0_15 = arith.constant 0 : index
    %17 = vector.load %arg6[%c0_14, %c0_15] : memref<1x128xf32, #tpu.memory_space<vmem>>, vector<1x128xf32>
    %18 = vector.broadcast %17 : vector<1x128xf32> to vector<16x128xf32>
    %19 = arith.addf %16, %18 : vector<16x128xf32>
    %20 = arith.truncf %19 : vector<16x128xf32> to vector<16x128xbf16>
    %c0_16 = arith.constant 0 : index
    %c0_17 = arith.constant 0 : index
    %21 = vector.load %arg7[%c0_16, %c0_17] : memref<16x128xbf16, #tpu.memory_space<vmem>>, vector<16x128xbf16>
    tpu.vector_store %arg7[%c0_16, %c0_17], %20 {strides = array<i32>} : memref<16x128xbf16, #tpu.memory_space<vmem>>, vector<16x128xbf16>,
    return
  }
}

</mosaic_0001>

<llo_original>
// kernel: policy_fn.1
$region0: #{policy_fn.1}
  #allocation0 [shape = 'u32[]', space=smem, size = 0x4, offset = 0x4, fixed_abs, tag = 'smem constant byte address 0x4 - core index']
  #allocation1 [shape = 'u32[144,128]{1,0:T(1,128)}', space=vmem, size = 0x12000, scoped, tag = 'internal scratch']
  %s0 = inlined_call_operand.vmem [shape: f32[16,1024], index: 0, kind: input, shape index: {}]
  %s1 = inlined_call_operand.vmem [shape: f32[16,128], index: 1, kind: input, shape index: {}]
  %s2 = inlined_call_operand.hbm [shape: bf16[1024,128], index: 2, kind: input, shape index: {}]
  %s3 = inlined_call_operand.vmem [shape: bf16[128,128], index: 3, kind: input, shape index: {}]
  %s4 = inlined_call_operand.vmem [shape: f32[1,128], index: 4, kind: input, shape index: {}, may-alias: {4,6}]
  %s5 = inlined_call_operand.vmem [shape: bf16[128,128], index: 5, kind: input, shape index: {}]
  %s6 = inlined_call_operand.vmem [shape: f32[1,128], index: 6, kind: input, shape index: {}, may-alias: {4,6}]
  %s7 = inlined_call_operand.vmem [shape: bf16[16,128], index: 7, kind: output, shape index: {}]
  %s8 = sld [smem:[#allocation0]]
  $region42: #{policy_fn.1} parent=0
    _
  %s10 = ssub.s32 1, %s8
  %s11 = scalar_select 0, %s10, %s8
  $region1: #{policy_fn.1} parent=0
    #allocation2 [shape = 'u8[262144]{0}', space=vmem, size = 0x40000, scoped, tag = 'input window, operand 2, single buffered']
    #allocation3 [shape = 's32[1]{0}', space=sflag, size = 0x4, scoped, tag = 'scoped memory for policy_fn.1']
    %12 = vsyncpa [#allocation3], 0
    // Predicated region
    $region2: #{policy_fn.1} parent=1 // pred_check
      _
    $region3: #{policy_fn.1} parent=1 // pred_check_branch
      %14 = sbr.rel (0) target = $region5
    $region4: #{policy_fn.1} parent=1 // pred_region
      _
    $region5: #{policy_fn.1} parent=1 // pred_fallthru
      _
    // Predicated region
    $region6: #{policy_fn.1} parent=1 // pred_check
      _
    $region7: #{policy_fn.1} parent=1 // pred_check_branch
      %16 = sbr.rel (0) target = $region9
    $region8: #{policy_fn.1} parent=1 // pred_region
      _
    $region9: #{policy_fn.1} parent=1 // pred_fallthru
      _
    // Predicated region
    $region10: #{policy_fn.1} parent=1 // pred_check
      _
    $region11: #{policy_fn.1} parent=1 // pred_check_branch
      %18 = sbr.rel (0) target = $region13
    $region12: #{policy_fn.1} parent=1 // pred_region
      %s20 = ssub.s32 8192, 8192
      %21 = vsyncadd [#allocation3], %s20
      %s22 = sshll.u32 [#allocation2], 4
      %s23 = int_to_ptr.vmem [resolvable:$true] %s22
      %28 = dma.hbm_to_vmem [thread:$0]  %s2, 8192, %s23, [#allocation3], 64, 64, 4
    $region13: #{policy_fn.1} parent=1 // pred_fallthru
      _
    // Predicated region
    $region14: #{policy_fn.1} parent=1 // pred_check
      _
    $region15: #{policy_fn.1} parent=1 // pred_check_branch
      %30 = sbr.rel (0) target = $region17
    $region16: #{policy_fn.1} parent=1 // pred_region
      _
    $region17: #{policy_fn.1} parent=1 // pred_fallthru
      _
    // Predicated region
    $region18: #{policy_fn.1} parent=1 // pred_check
      _
    $region19: #{policy_fn.1} parent=1 // pred_check_branch
      %32 = sbr.rel (0) target = $region21
    $region20: #{policy_fn.1} parent=1 // pred_region
      _
    $region21: #{policy_fn.1} parent=1 // pred_fallthru
      _
    // Predicated region
    $region22: #{policy_fn.1} parent=1 // pred_check
      _
    $region23: #{policy_fn.1} parent=1 // pred_check_branch
      %34 = sbr.rel (0) target = $region25
    $region24: #{policy_fn.1} parent=1 // pred_region
      _
    $region25: #{policy_fn.1} parent=1 // pred_fallthru
      _
    // Predicated region
    $region26: #{policy_fn.1} parent=1 // pred_check
      _
    $region27: #{policy_fn.1} parent=1 // pred_check_branch
      %36 = sbr.rel (0) target = $region29
    $region28: #{policy_fn.1} parent=1 // pred_region
      _
    $region29: #{policy_fn.1} parent=1 // pred_fallthru
      _
    // Predicated region
    $region30: #{policy_fn.1} parent=1 // pred_check
      _
    $region31: #{policy_fn.1} parent=1 // pred_check_branch
      %38 = sbr.rel (0) target = $region33
    $region32: #{policy_fn.1} parent=1 // pred_region
      %39 = dma.done [#allocation3], 8192
    $region33: #{policy_fn.1} parent=1 // pred_fallthru
      _
    %v41 = vld [vmem:[%s0] sm:$0xff]
    %v42 = vld [vmem:[%s0 + $0x8] sm:$0xff]
    %v43 = vld [vmem:[%s0 + $0x10] sm:$0xff]
    %v44 = vld [vmem:[%s0 + $0x18] sm:$0xff]
    %v45 = vld [vmem:[%s0 + $0x20] sm:$0xff]
    %v46 = vld [vmem:[%s0 + $0x28] sm:$0xff]
    %v47 = vld [vmem:[%s0 + $0x30] sm:$0xff]
    %v48 = vld [vmem:[%s0 + $0x38] sm:$0xff]
    %v49 = vld [vmem:[%s0 + $0x40] sm:$0xff]
    %v50 = vld [vmem:[%s0 + $0x48] sm:$0xff]
    %v51 = vld [vmem:[%s0 + $0x50] sm:$0xff]
    %v52 = vld [vmem:[%s0 + $0x58] sm:$0xff]
    %v53 = vld [vmem:[%s0 + $0x60] sm:$0xff]
    %v54 = vld [vmem:[%s0 + $0x68] sm:$0xff]
    %v55 = vld [vmem:[%s0 + $0x70] sm:$0xff]
    %v56 = vld [vmem:[%s0 + $0x78] sm:$0xff]
    %v57 = vpack.c.bf16 %v49, %v41
    %v58 = vpack.c.bf16 %v50, %v42
    %v59 = vpack.c.bf16 %v51, %v43
    %v60 = vpack.c.bf16 %v52, %v44
    %v61 = vpack.c.bf16 %v53, %v45
    %v62 = vpack.c.bf16 %v54, %v46
    %v63 = vpack.c.bf16 %v55, %v47
    %v64 = vpack.c.bf16 %v56, %v48
    %v65 = vld [vmem:[%s1] sm:$0xff]
    %v66 = vld [vmem:[%s1 + $0x8] sm:$0xff]
    %v67 = vpack.c.bf16 %v66, %v65
    %v68 = vld [vmem:[#allocation2] sm:$0xf]
    %v69 = vld [vmem:[#allocation2 + $0x4] sm:$0xf]
    %v70 = vld [vmem:[#allocation2 + $0x8] sm:$0xf]
    %v71 = vld [vmem:[#allocation2 + $0xc] sm:$0xf]
    %v72 = vld [vmem:[#allocation2 + $0x10] sm:$0xf]
    %v73 = vld [vmem:[#allocation2 + $0x14] sm:$0xf]
    %v74 = vld [vmem:[#allocation2 + $0x18] sm:$0xf]
    %v75 = vld [vmem:[#allocation2 + $0x1c] sm:$0xf]
    %v76 = vld [vmem:[#allocation2 + $0x20] sm:$0xf]
    %v77 = vld [vmem:[#allocation2 + $0x24] sm:$0xf]
    %v78 = vld [vmem:[#allocation2 + $0x28] sm:$0xf]
    %v79 = vld [vmem:[#allocation2 + $0x2c] sm:$0xf]
    %v80 = vld [vmem:[#allocation2 + $0x30] sm:$0xf]
    %v81 = vld [vmem:[#allocation2 + $0x34] sm:$0xf]
    %v82 = vld [vmem:[#allocation2 + $0x38] sm:$0xf]
    %v83 = vld [vmem:[#allocation2 + $0x3c] sm:$0xf]
    %v84 = vld [vmem:[#allocation2 + $0x40] sm:$0xf]
    %v85 = vld [vmem:[#allocation2 + $0x44] sm:$0xf]
    %v86 = vld [vmem:[#allocation2 + $0x48] sm:$0xf]
    %v87 = vld [vmem:[#allocation2 + $0x4c] sm:$0xf]
    %v88 = vld [vmem:[#allocation2 + $0x50] sm:$0xf]
    %v89 = vld [vmem:[#allocation2 + $0x54] sm:$0xf]
    %v90 = vld [vmem:[#allocation2 + $0x58] sm:$0xf]
    %v91 = vld [vmem:[#allocation2 + $0x5c] sm:$0xf]
    %v92 = vld [vmem:[#allocation2 + $0x60] sm:$0xf]
    %v93 = vld [vmem:[#allocation2 + $0x64] sm:$0xf]
    %v94 = vld [vmem:[#allocation2 + $0x68] sm:$0xf]
    %v95 = vld [vmem:[#allocation2 + $0x6c] sm:$0xf]
    %v96 = vld [vmem:[#allocation2 + $0x70] sm:$0xf]
    %v97 = vld [vmem:[#allocation2 + $0x74] sm:$0xf]
    %v98 = vld [vmem:[#allocation2 + $0x78] sm:$0xf]
    %v99 = vld [vmem:[#allocation2 + $0x7c] sm:$0xf]
    %v100 = vld [vmem:[#allocation2 + $0x80] sm:$0xf]
    %v101 = vld [vmem:[#allocation2 + $0x84] sm:$0xf]
    %v102 = vld [vmem:[#allocation2 + $0x88] sm:$0xf]
    %v103 = vld [vmem:[#allocation2 + $0x8c] sm:$0xf]
    %v104 = vld [vmem:[#allocation2 + $0x90] sm:$0xf]
    %v105 = vld [vmem:[#allocation2 + $0x94] sm:$0xf]
    %v106 = vld [vmem:[#allocation2 + $0x98] sm:$0xf]
    %v107 = vld [vmem:[#allocation2 + $0x9c] sm:$0xf]
    %v108 = vld [vmem:[#allocation2 + $0xa0] sm:$0xf]
    %v109 = vld [vmem:[#allocation2 + $0xa4] sm:$0xf]
    %v110 = vld [vmem:[#allocation2 + $0xa8] sm:$0xf]
    %v111 = vld [vmem:[#allocation2 + $0xac] sm:$0xf]
    %v112 = vld [vmem:[#allocation2 + $0xb0] sm:$0xf]
    %v113 = vld [vmem:[#allocation2 + $0xb4] sm:$0xf]
    %v114 = vld [vmem:[#allocation2 + $0xb8] sm:$0xf]
    %v115 = vld [vmem:[#allocation2 + $0xbc] sm:$0xf]
    %v116 = vld [vmem:[#allocation2 + $0xc0] sm:$0xf]
    %v117 = vld [vmem:[#allocation2 + $0xc4] sm:$0xf]
    %v118 = vld [vmem:[#allocation2 + $0xc8] sm:$0xf]
    %v119 = vld [vmem:[#allocation2 + $0xcc] sm:$0xf]
    %v120 = vld [vmem:[#allocation2 + $0xd0] sm:$0xf]
    %v121 = vld [vmem:[#allocation2 + $0xd4] sm:$0xf]
    %v122 = vld [vmem:[#allocation2 + $0xd8] sm:$0xf]
    %v123 = vld [vmem:[#allocation2 + $0xdc] sm:$0xf]
    %v124 = vld [vmem:[#allocation2 + $0xe0] sm:$0xf]
    %v125 = vld [vmem:[#allocation2 + $0xe4] sm:$0xf]
    %v126 = vld [vmem:[#allocation2 + $0xe8] sm:$0xf]
    %v127 = vld [vmem:[#allocation2 + $0xec] sm:$0xf]
    %v128 = vld [vmem:[#allocation2 + $0xf0] sm:$0xf]
    %v129 = vld [vmem:[#allocation2 + $0xf4] sm:$0xf]
    %v130 = vld [vmem:[#allocation2 + $0xf8] sm:$0xf]
    %v131 = vld [vmem:[#allocation2 + $0xfc] sm:$0xf]
    %v132 = vld [vmem:[#allocation2 + $0x100] sm:$0xf]
    %v133 = vld [vmem:[#allocation2 + $0x104] sm:$0xf]
    %v134 = vld [vmem:[#allocation2 + $0x108] sm:$0xf]
    %v135 = vld [vmem:[#allocation2 + $0x10c] sm:$0xf]
    %v136 = vld [vmem:[#allocation2 + $0x110] sm:$0xf]
    %v137 = vld [vmem:[#allocation2 + $0x114] sm:$0xf]
    %v138 = vld [vmem:[#allocation2 + $0x118] sm:$0xf]
    %v139 = vld [vmem:[#allocation2 + $0x11c] sm:$0xf]
    %v140 = vld [vmem:[#allocation2 + $0x120] sm:$0xf]
    %v141 = vld [vmem:[#allocation2 + $0x124] sm:$0xf]
    %v142 = vld [vmem:[#allocation2 + $0x128] sm:$0xf]
    %v143 = vld [vmem:[#allocation2 + $0x12c] sm:$0xf]
    %v144 = vld [vmem:[#allocation2 + $0x130] sm:$0xf]
    %v145 = vld [vmem:[#allocation2 + $0x134] sm:$0xf]
    %v146 = vld [vmem:[#allocation2 + $0x138] sm:$0xf]
    %v147 = vld [vmem:[#allocation2 + $0x13c] sm:$0xf]
    %v148 = vld [vmem:[#allocation2 + $0x140] sm:$0xf]
    %v149 = vld [vmem:[#allocation2 + $0x144] sm:$0xf]
    %v150 = vld [vmem:[#allocation2 + $0x148] sm:$0xf]
    %v151 = vld [vmem:[#allocation2 + $0x14c] sm:$0xf]
    %v152 = vld [vmem:[#allocation2 + $0x150] sm:$0xf]
    %v153 = vld [vmem:[#allocation2 + $0x154] sm:$0xf]
    %v154 = vld [vmem:[#allocation2 + $0x158] sm:$0xf]
    %v155 = vld [vmem:[#allocation2 + $0x15c] sm:$0xf]
    %v156 = vld [vmem:[#allocation2 + $0x160] sm:$0xf]
    %v157 = vld [vmem:[#allocation2 + $0x164] sm:$0xf]
    %v158 = vld [vmem:[#allocation2 + $0x168] sm:$0xf]
    %v159 = vld [vmem:[#allocation2 + $0x16c] sm:$0xf]
    %v160 = vld [vmem:[#allocation2 + $0x170] sm:$0xf]
    %v161 = vld [vmem:[#allocation2 + $0x174] sm:$0xf]
    %v162 = vld [vmem:[#allocation2 + $0x178] sm:$0xf]
    %v163 = vld [vmem:[#allocation2 + $0x17c] sm:$0xf]
    %v164 = vld [vmem:[#allocation2 + $0x180] sm:$0xf]
    %v165 = vld [vmem:[#allocation2 + $0x184] sm:$0xf]
    %v166 = vld [vmem:[#allocation2 + $0x188] sm:$0xf]
    %v167 = vld [vmem:[#allocation2 + $0x18c] sm:$0xf]
    %v168 = vld [vmem:[#allocation2 + $0x190] sm:$0xf]
    %v169 = vld [vmem:[#allocation2 + $0x194] sm:$0xf]
    %v170 = vld [vmem:[#allocation2 + $0x198] sm:$0xf]
    %v171 = vld [vmem:[#allocation2 + $0x19c] sm:$0xf]
    %v172 = vld [vmem:[#allocation2 + $0x1a0] sm:$0xf]
    %v173 = vld [vmem:[#allocation2 + $0x1a4] sm:$0xf]
    %v174 = vld [vmem:[#allocation2 + $0x1a8] sm:$0xf]
    %v175 = vld [vmem:[#allocation2 + $0x1ac] sm:$0xf]
    %v176 = vld [vmem:[#allocation2 + $0x1b0] sm:$0xf]
    %v177 = vld [vmem:[#allocation2 + $0x1b4] sm:$0xf]
    %v178 = vld [vmem:[#allocation2 + $0x1b8] sm:$0xf]
    %v179 = vld [vmem:[#allocation2 + $0x1bc] sm:$0xf]
    %v180 = vld [vmem:[#allocation2 + $0x1c0] sm:$0xf]
    %v181 = vld [vmem:[#allocation2 + $0x1c4] sm:$0xf]
    %v182 = vld [vmem:[#allocation2 + $0x1c8] sm:$0xf]
    %v183 = vld [vmem:[#allocation2 + $0x1cc] sm:$0xf]
    %v184 = vld [vmem:[#allocation2 + $0x1d0] sm:$0xf]
    %v185 = vld [vmem:[#allocation2 + $0x1d4] sm:$0xf]
    %v186 = vld [vmem:[#allocation2 + $0x1d8] sm:$0xf]
    %v187 = vld [vmem:[#allocation2 + $0x1dc] sm:$0xf]
    %v188 = vld [vmem:[#allocation2 + $0x1e0] sm:$0xf]
    %v189 = vld [vmem:[#allocation2 + $0x1e4] sm:$0xf]
    %v190 = vld [vmem:[#allocation2 + $0x1e8] sm:$0xf]
    %v191 = vld [vmem:[#allocation2 + $0x1ec] sm:$0xf]
    %v192 = vld [vmem:[#allocation2 + $0x1f0] sm:$0xf]
    %v193 = vld [vmem:[#allocation2 + $0x1f4] sm:$0xf]
    %v194 = vld [vmem:[#allocation2 + $0x1f8] sm:$0xf]
    %v195 = vld [vmem:[#allocation2 + $0x1fc] sm:$0xf]
    %v196 = vld [vmem:[%s3] sm:$0xf]
    %v197 = vld [vmem:[%s3 + $0x4] sm:$0xf]
    %v198 = vld [vmem:[%s3 + $0x8] sm:$0xf]
    %v199 = vld [vmem:[%s3 + $0xc] sm:$0xf]
    %v200 = vld [vmem:[%s3 + $0x10] sm:$0xf]
    %v201 = vld [vmem:[%s3 + $0x14] sm:$0xf]
    %v202 = vld [vmem:[%s3 + $0x18] sm:$0xf]
    %v203 = vld [vmem:[%s3 + $0x1c] sm:$0xf]
    %v204 = vld [vmem:[%s3 + $0x20] sm:$0xf]
    %v205 = vld [vmem:[%s3 + $0x24] sm:$0xf]
    %v206 = vld [vmem:[%s3 + $0x28] sm:$0xf]
    %v207 = vld [vmem:[%s3 + $0x2c] sm:$0xf]
    %v208 = vld [vmem:[%s3 + $0x30] sm:$0xf]
    %v209 = vld [vmem:[%s3 + $0x34] sm:$0xf]
    %v210 = vld [vmem:[%s3 + $0x38] sm:$0xf]
    %v211 = vld [vmem:[%s3 + $0x3c] sm:$0xf]
    %v228 = vunpack.c.l.b16 %v196
    %v229 = vunpack.c.l.b16 %v197
    %v230 = vunpack.c.l.b16 %v198
    %v231 = vunpack.c.l.b16 %v199
    %v232 = vunpack.c.l.b16 %v200
    %v233 = vunpack.c.l.b16 %v201
    %v234 = vunpack.c.l.b16 %v202
    %v235 = vunpack.c.l.b16 %v203
    %v236 = vunpack.c.l.b16 %v204
    %v237 = vunpack.c.l.b16 %v205
    %v238 = vunpack.c.l.b16 %v206
    %v239 = vunpack.c.l.b16 %v207
    %v240 = vunpack.c.l.b16 %v208
    %v241 = vunpack.c.l.b16 %v209
    %v242 = vunpack.c.l.b16 %v210
    %v243 = vunpack.c.l.b16 %v211
    %v244 = vpack.c.b16 %v229, %v228
    %v245 = vpack.c.b16 %v231, %v230
    %v246 = vpack.c.b16 %v233, %v232
    %v247 = vpack.c.b16 %v235, %v234
    %v248 = vpack.c.b16 %v237, %v236
    %v249 = vpack.c.b16 %v239, %v238
    %v250 = vpack.c.b16 %v241, %v240
    %v251 = vpack.c.b16 %v243, %v242
    %260 = vmatprep.subr.bf16.mxu0 0
    %261 = vmatpush1.bf16.msra.mxu0 %v244
    %262 = vmatprep.subr.bf16.mxu0 0
    %263 = vmatpush1.bf16.msra.mxu0 %v245
    %264 = vmatprep.subr.bf16.mxu0 0
    %265 = vmatpush1.bf16.msra.mxu0 %v246
    %266 = vmatprep.subr.bf16.mxu0 0
    %267 = vmatpush1.bf16.msra.mxu0 %v247
    %268 = vmatprep.subr.bf16.mxu0 0
    %269 = vmatpush1.bf16.msra.mxu0 %v248
    %270 = vmatprep.subr.bf16.mxu0 0
    %271 = vmatpush1.bf16.msra.mxu0 %v249
    %272 = vmatprep.subr.bf16.mxu0 0
    %273 = vmatpush1.bf16.msra.mxu0 %v250
    %274 = vmatprep.subr.bf16.mxu0 0
    %275 = vmatpush1.bf16.msra.mxu0 %v251
    %276 = vmatprep.subr.bf16.mxu0 0
    %277 = vmatpush1.bf16.msra.mxu0 0
    %278 = vmatprep.subr.bf16.mxu0 0
    %279 = vmatpush1.bf16.msra.mxu0 0
    %280 = vmatprep.subr.bf16.mxu0 0
    %281 = vmatpush1.bf16.msra.mxu0 0
    %282 = vmatprep.subr.bf16.mxu0 0
    %283 = vmatpush1.bf16.msra.mxu0 0
    %284 = vmatprep.subr.bf16.mxu0 0
    %285 = vmatpush1.bf16.msra.mxu0 0
    %286 = vmatprep.subr.bf16.mxu0 0
    %287 = vmatpush1.bf16.msra.mxu0 0
    %288 = vmatprep.subr.bf16.mxu0 0
    %289 = vmatpush1.bf16.msra.mxu0 0
    %290 = vmatprep.subr.bf16.mxu0 0
    %291 = vmatpush1.bf16.msra.mxu0 0
    %292 = vmatprep.mubr.bf16.mxu0 0
    %293 = vmatmul.mubr.bf16.gmra.mrb[0].mxu0 %v67
    %v294 = vpop.f32.mrb[0].mxu0
    %v295 = vadd.f32 0.0, %v294
    %v296 = vpop.f32.mrb[0].mxu0
    %v297 = vpop.f32.mrb[0].mxu0
    %v298 = vadd.f32 0.0, %v297
    %v299 = vpop.f32.mrb[0].mxu0
    %300 = vdwg.mxu0
    %v429 = vunpack.c.l.b16 %v68
    %v430 = vunpack.c.l.b16 %v69
    %v431 = vunpack.c.l.b16 %v70
    %v432 = vunpack.c.l.b16 %v71
    %v433 = vunpack.c.l.b16 %v72
    %v434 = vunpack.c.l.b16 %v73
    %v435 = vunpack.c.l.b16 %v74
    %v436 = vunpack.c.l.b16 %v75
    %v437 = vunpack.c.l.b16 %v76
    %v438 = vunpack.c.l.b16 %v77
    %v439 = vunpack.c.l.b16 %v78
    %v440 = vunpack.c.l.b16 %v79
    %v441 = vunpack.c.l.b16 %v80
    %v442 = vunpack.c.l.b16 %v81
    %v443 = vunpack.c.l.b16 %v82
    %v444 = vunpack.c.l.b16 %v83
    %v445 = vunpack.c.l.b16 %v84
    %v446 = vunpack.c.l.b16 %v85
    %v447 = vunpack.c.l.b16 %v86
    %v448 = vunpack.c.l.b16 %v87
    %v449 = vunpack.c.l.b16 %v88
    %v450 = vunpack.c.l.b16 %v89
    %v451 = vunpack.c.l.b16 %v90
    %v452 = vunpack.c.l.b16 %v91
    %v453 = vunpack.c.l.b16 %v92
    %v454 = vunpack.c.l.b16 %v93
    %v455 = vunpack.c.l.b16 %v94
    %v456 = vunpack.c.l.b16 %v95
    %v457 = vunpack.c.l.b16 %v96
    %v458 = vunpack.c.l.b16 %v97
    %v459 = vunpack.c.l.b16 %v98
    %v460 = vunpack.c.l.b16 %v99
    %v461 = vunpack.c.l.b16 %v100
    %v462 = vunpack.c.l.b16 %v101
    %v463 = vunpack.c.l.b16 %v102
    %v464 = vunpack.c.l.b16 %v103
    %v465 = vunpack.c.l.b16 %v104
    %v466 = vunpack.c.l.b16 %v105
    %v467 = vunpack.c.l.b16 %v106
    %v468 = vunpack.c.l.b16 %v107
    %v469 = vunpack.c.l.b16 %v108
    %v470 = vunpack.c.l.b16 %v109
    %v471 = vunpack.c.l.b16 %v110
    %v472 = vunpack.c.l.b16 %v111
    %v473 = vunpack.c.l.b16 %v112
    %v474 = vunpack.c.l.b16 %v113
    %v475 = vunpack.c.l.b16 %v114
    %v476 = vunpack.c.l.b16 %v115
    %v477 = vunpack.c.l.b16 %v116
    %v478 = vunpack.c.l.b16 %v117
    %v479 = vunpack.c.l.b16 %v118
    %v480 = vunpack.c.l.b16 %v119
    %v481 = vunpack.c.l.b16 %v120
    %v482 = vunpack.c.l.b16 %v121
    %v483 = vunpack.c.l.b16 %v122
    %v484 = vunpack.c.l.b16 %v123
    %v485 = vunpack.c.l.b16 %v124
    %v486 = vunpack.c.l.b16 %v125
    %v487 = vunpack.c.l.b16 %v126
    %v488 = vunpack.c.l.b16 %v127
    %v489 = vunpack.c.l.b16 %v128
    %v490 = vunpack.c.l.b16 %v129
    %v491 = vunpack.c.l.b16 %v130
    %v492 = vunpack.c.l.b16 %v131
    %v493 = vunpack.c.l.b16 %v132
    %v494 = vunpack.c.l.b16 %v133
    %v495 = vunpack.c.l.b16 %v134
    %v496 = vunpack.c.l.b16 %v135
    %v497 = vunpack.c.l.b16 %v136
    %v498 = vunpack.c.l.b16 %v137
    %v499 = vunpack.c.l.b16 %v138
    %v500 = vunpack.c.l.b16 %v139
    %v501 = vunpack.c.l.b16 %v140
    %v502 = vunpack.c.l.b16 %v141
    %v503 = vunpack.c.l.b16 %v142
    %v504 = vunpack.c.l.b16 %v143
    %v505 = vunpack.c.l.b16 %v144
    %v506 = vunpack.c.l.b16 %v145
    %v507 = vunpack.c.l.b16 %v146
    %v508 = vunpack.c.l.b16 %v147
    %v509 = vunpack.c.l.b16 %v148
    %v510 = vunpack.c.l.b16 %v149
    %v511 = vunpack.c.l.b16 %v150
    %v512 = vunpack.c.l.b16 %v151
    %v513 = vunpack.c.l.b16 %v152
    %v514 = vunpack.c.l.b16 %v153
    %v515 = vunpack.c.l.b16 %v154
    %v516 = vunpack.c.l.b16 %v155
    %v517 = vunpack.c.l.b16 %v156
    %v518 = vunpack.c.l.b16 %v157
    %v519 = vunpack.c.l.b16 %v158
    %v520 = vunpack.c.l.b16 %v159
    %v521 = vunpack.c.l.b16 %v160
    %v522 = vunpack.c.l.b16 %v161
    %v523 = vunpack.c.l.b16 %v162
    %v524 = vunpack.c.l.b16 %v163
    %v525 = vunpack.c.l.b16 %v164
    %v526 = vunpack.c.l.b16 %v165
    %v527 = vunpack.c.l.b16 %v166
    %v528 = vunpack.c.l.b16 %v167
    %v529 = vunpack.c.l.b16 %v168
    %v530 = vunpack.c.l.b16 %v169
    %v531 = vunpack.c.l.b16 %v170
    %v532 = vunpack.c.l.b16 %v171
    %v533 = vunpack.c.l.b16 %v172
    %v534 = vunpack.c.l.b16 %v173
    %v535 = vunpack.c.l.b16 %v174
    %v536 = vunpack.c.l.b16 %v175
    %v537 = vunpack.c.l.b16 %v176
    %v538 = vunpack.c.l.b16 %v177
    %v539 = vunpack.c.l.b16 %v178
    %v540 = vunpack.c.l.b16 %v179
    %v541 = vunpack.c.l.b16 %v180
    %v542 = vunpack.c.l.b16 %v181
    %v543 = vunpack.c.l.b16 %v182
    %v544 = vunpack.c.l.b16 %v183
    %v545 = vunpack.c.l.b16 %v184
    %v546 = vunpack.c.l.b16 %v185
    %v547 = vunpack.c.l.b16 %v186
    %v548 = vunpack.c.l.b16 %v187
    %v549 = vunpack.c.l.b16 %v188
    %v550 = vunpack.c.l.b16 %v189
    %v551 = vunpack.c.l.b16 %v190
    %v552 = vunpack.c.l.b16 %v191
    %v553 = vunpack.c.l.b16 %v192
    %v554 = vunpack.c.l.b16 %v193
    %v555 = vunpack.c.l.b16 %v194
    %v556 = vunpack.c.l.b16 %v195
    %v557 = vpack.c.b16 %v430, %v429
    %v558 = vpack.c.b16 %v432, %v431
    %v559 = vpack.c.b16 %v434, %v433
    %v560 = vpack.c.b16 %v436, %v435
    %v561 = vpack.c.b16 %v438, %v437
    %v562 = vpack.c.b16 %v440, %v439
    %v563 = vpack.c.b16 %v442, %v441
    %v564 = vpack.c.b16 %v444, %v443
    %v565 = vpack.c.b16 %v446, %v445
    %v566 = vpack.c.b16 %v448, %v447
    %v567 = vpack.c.b16 %v450, %v449
    %v568 = vpack.c.b16 %v452, %v451
    %v569 = vpack.c.b16 %v454, %v453
    %v570 = vpack.c.b16 %v456, %v455
    %v571 = vpack.c.b16 %v458, %v457
    %v572 = vpack.c.b16 %v460, %v459
    %v573 = vpack.c.b16 %v462, %v461
    %v574 = vpack.c.b16 %v464, %v463
    %v575 = vpack.c.b16 %v466, %v465
    %v576 = vpack.c.b16 %v468, %v467
    %v577 = vpack.c.b16 %v470, %v469
    %v578 = vpack.c.b16 %v472, %v471
    %v579 = vpack.c.b16 %v474, %v473
    %v580 = vpack.c.b16 %v476, %v475
    %v581 = vpack.c.b16 %v478, %v477
    %v582 = vpack.c.b16 %v480, %v479
    %v583 = vpack.c.b16 %v482, %v481
    %v584 = vpack.c.b16 %v484, %v483
    %v585 = vpack.c.b16 %v486, %v485
    %v586 = vpack.c.b16 %v488, %v487
    %v587 = vpack.c.b16 %v490, %v489
    %v588 = vpack.c.b16 %v492, %v491
    %v589 = vpack.c.b16 %v494, %v493
    %v590 = vpack.c.b16 %v496, %v495
    %v591 = vpack.c.b16 %v498, %v497
    %v592 = vpack.c.b16 %v500, %v499
    %v593 = vpack.c.b16 %v502, %v501
    %v594 = vpack.c.b16 %v504, %v503
    %v595 = vpack.c.b16 %v506, %v505
    %v596 = vpack.c.b16 %v508, %v507
    %v597 = vpack.c.b16 %v510, %v509
    %v598 = vpack.c.b16 %v512, %v511
    %v599 = vpack.c.b16 %v514, %v513
    %v600 = vpack.c.b16 %v516, %v515
    %v601 = vpack.c.b16 %v518, %v517
    %v602 = vpack.c.b16 %v520, %v519
    %v603 = vpack.c.b16 %v522, %v521
    %v604 = vpack.c.b16 %v524, %v523
    %v605 = vpack.c.b16 %v526, %v525
    %v606 = vpack.c.b16 %v528, %v527
    %v607 = vpack.c.b16 %v530, %v529
    %v608 = vpack.c.b16 %v532, %v531
    %v609 = vpack.c.b16 %v534, %v533
    %v610 = vpack.c.b16 %v536, %v535
    %v611 = vpack.c.b16 %v538, %v537
    %v612 = vpack.c.b16 %v540, %v539
    %v613 = vpack.c.b16 %v542, %v541
    %v614 = vpack.c.b16 %v544, %v543
    %v615 = vpack.c.b16 %v546, %v545
    %v616 = vpack.c.b16 %v548, %v547
    %v617 = vpack.c.b16 %v550, %v549
    %v618 = vpack.c.b16 %v552, %v551
    %v619 = vpack.c.b16 %v554, %v553
    %v620 = vpack.c.b16 %v556, %v555
    %685 = vmatprep.subr.bf16.mxu0 0
    %686 = vmatpush1.bf16.msra.mxu0 %v557
    %687 = vmatprep.subr.bf16.mxu0 0
    %688 = vmatpush1.bf16.msra.mxu0 %v558
    %689 = vmatprep.subr.bf16.mxu0 0
    %690 = vmatpush1.bf16.msra.mxu0 %v559
    %691 = vmatprep.subr.bf16.mxu0 0
    %692 = vmatpush1.bf16.msra.mxu0 %v560
    %693 = vmatprep.subr.bf16.mxu0 0
    %694 = vmatpush1.bf16.msra.mxu0 %v561
    %695 = vmatprep.subr.bf16.mxu0 0
    %696 = vmatpush1.bf16.msra.mxu0 %v562
    %697 = vmatprep.subr.bf16.mxu0 0
    %698 = vmatpush1.bf16.msra.mxu0 %v563
    %699 = vmatprep.subr.bf16.mxu0 0
    %700 = vmatpush1.bf16.msra.mxu0 %v564
    %701 = vmatprep.subr.bf16.mxu0 0
    %702 = vmatpush1.bf16.msra.mxu0 %v565
    %703 = vmatprep.subr.bf16.mxu0 0
    %704 = vmatpush1.bf16.msra.mxu0 %v566
    %705 = vmatprep.subr.bf16.mxu0 0
    %706 = vmatpush1.bf16.msra.mxu0 %v567
    %707 = vmatprep.subr.bf16.mxu0 0
    %708 = vmatpush1.bf16.msra.mxu0 %v568
    %709 = vmatprep.subr.bf16.mxu0 0
    %710 = vmatpush1.bf16.msra.mxu0 %v569
    %711 = vmatprep.subr.bf16.mxu0 0
    %712 = vmatpush1.bf16.msra.mxu0 %v570
    %713 = vmatprep.subr.bf16.mxu0 0
    %714 = vmatpush1.bf16.msra.mxu0 %v571
    %715 = vmatprep.subr.bf16.mxu0 0
    %716 = vmatpush1.bf16.msra.mxu0 %v572
    %717 = vmatprep.mubr.bf16.mxu0 %v58
    %718 = vmatmul.mubr.bf16.gmra.mrb[0].mxu0 %v57
    %v719 = vpop.f32.mrb[0].mxu0
    %v720 = vadd.f32 %v295, %v719
    %v721 = vpop.f32.mrb[0].mxu0
    %v722 = vpop.f32.mrb[0].mxu0
    %v723 = vadd.f32 %v298, %v722
    %v724 = vpop.f32.mrb[0].mxu0
    %725 = vdwg.mxu0
    %726 = vmatprep.subr.bf16.mxu0 0
    %727 = vmatpush1.bf16.msra.mxu0 %v573
    %728 = vmatprep.subr.bf16.mxu0 0
    %729 = vmatpush1.bf16.msra.mxu0 %v574
    %730 = vmatprep.subr.bf16.mxu0 0
    %731 = vmatpush1.bf16.msra.mxu0 %v575
    %732 = vmatprep.subr.bf16.mxu0 0
    %733 = vmatpush1.bf16.msra.mxu0 %v576
    %734 = vmatprep.subr.bf16.mxu0 0
    %735 = vmatpush1.bf16.msra.mxu0 %v577
    %736 = vmatprep.subr.bf16.mxu0 0
    %737 = vmatpush1.bf16.msra.mxu0 %v578
    %738 = vmatprep.subr.bf16.mxu0 0
    %739 = vmatpush1.bf16.msra.mxu0 %v579
    %740 = vmatprep.subr.bf16.mxu0 0
    %741 = vmatpush1.bf16.msra.mxu0 %v580
    %742 = vmatprep.subr.bf16.mxu0 0
    %743 = vmatpush1.bf16.msra.mxu0 %v581
    %744 = vmatprep.subr.bf16.mxu0 0
    %745 = vmatpush1.bf16.msra.mxu0 %v582
    %746 = vmatprep.subr.bf16.mxu0 0
    %747 = vmatpush1.bf16.msra.mxu0 %v583
    %748 = vmatprep.subr.bf16.mxu0 0
    %749 = vmatpush1.bf16.msra.mxu0 %v584
    %750 = vmatprep.subr.bf16.mxu0 0
    %751 = vmatpush1.bf16.msra.mxu0 %v585
    %752 = vmatprep.subr.bf16.mxu0 0
    %753 = vmatpush1.bf16.msra.mxu0 %v586
    %754 = vmatprep.subr.bf16.mxu0 0
    %755 = vmatpush1.bf16.msra.mxu0 %v587
    %756 = vmatprep.subr.bf16.mxu0 0
    %757 = vmatpush1.bf16.msra.mxu0 %v588
    %758 = vmatprep.mubr.bf16.mxu0 %v60
    %759 = vmatmul.mubr.bf16.gmra.mrb[0].mxu0 %v59
    %v760 = vpop.f32.mrb[0].mxu0
    %v761 = vadd.f32 %v720, %v760
    %v762 = vpop.f32.mrb[0].mxu0
    %v763 = vpop.f32.mrb[0].mxu0
    %v764 = vadd.f32 %v723, %v763
    %v765 = vpop.f32.mrb[0].mxu0
    %766 = vdwg.mxu0
    %767 = vmatprep.subr.bf16.mxu0 0
    %768 = vmatpush1.bf16.msra.mxu0 %v589
    %769 = vmatprep.subr.bf16.mxu0 0
    %770 = vmatpush1.bf16.msra.mxu0 %v590
    %771 = vmatprep.subr.bf16.mxu0 0
    %772 = vmatpush1.bf16.msra.mxu0 %v591
    %773 = vmatprep.subr.bf16.mxu0 0
    %774 = vmatpush1.bf16.msra.mxu0 %v592
    %775 = vmatprep.subr.bf16.mxu0 0
    %776 = vmatpush1.bf16.msra.mxu0 %v593
    %777 = vmatprep.subr.bf16.mxu0 0
    %778 = vmatpush1.bf16.msra.mxu0 %v594
    %779 = vmatprep.subr.bf16.mxu0 0
    %780 = vmatpush1.bf16.msra.mxu0 %v595
    %781 = vmatprep.subr.bf16.mxu0 0
    %782 = vmatpush1.bf16.msra.mxu0 %v596
    %783 = vmatprep.subr.bf16.mxu0 0
    %784 = vmatpush1.bf16.msra.mxu0 %v597
    %785 = vmatprep.subr.bf16.mxu0 0
    %786 = vmatpush1.bf16.msra.mxu0 %v598
    %787 = vmatprep.subr.bf16.mxu0 0
    %788 = vmatpush1.bf16.msra.mxu0 %v599
    %789 = vmatprep.subr.bf16.mxu0 0
    %790 = vmatpush1.bf16.msra.mxu0 %v600
    %791 = vmatprep.subr.bf16.mxu0 0
    %792 = vmatpush1.bf16.msra.mxu0 %v601
    %793 = vmatprep.subr.bf16.mxu0 0
    %794 = vmatpush1.bf16.msra.mxu0 %v602
    %795 = vmatprep.subr.bf16.mxu0 0
    %796 = vmatpush1.bf16.msra.mxu0 %v603
    %797 = vmatprep.subr.bf16.mxu0 0
    %798 = vmatpush1.bf16.msra.mxu0 %v604
    %799 = vmatprep.mubr.bf16.mxu0 %v62
    %800 = vmatmul.mubr.bf16.gmra.mrb[0].mxu0 %v61
    %v801 = vpop.f32.mrb[0].mxu0
    %v802 = vadd.f32 %v761, %v801
    %v803 = vpop.f32.mrb[0].mxu0
    %v804 = vpop.f32.mrb[0].mxu0
    %v805 = vadd.f32 %v764, %v804
    %v806 = vpop.f32.mrb[0].mxu0
    %807 = vdwg.mxu0
    %808 = vmatprep.subr.bf16.mxu0 0
    %809 = vmatpush1.bf16.msra.mxu0 %v605
    %810 = vmatprep.subr.bf16.mxu0 0
    %811 = vmatpush1.bf16.msra.mxu0 %v606
    %812 = vmatprep.subr.bf16.mxu0 0
    %813 = vmatpush1.bf16.msra.mxu0 %v607
    %814 = vmatprep.subr.bf16.mxu0 0
    %815 = vmatpush1.bf16.msra.mxu0 %v608
    %816 = vmatprep.subr.bf16.mxu0 0
    %817 = vmatpush1.bf16.msra.mxu0 %v609
    %818 = vmatprep.subr.bf16.mxu0 0
    %819 = vmatpush1.bf16.msra.mxu0 %v610
    %820 = vmatprep.subr.bf16.mxu0 0
    %821 = vmatpush1.bf16.msra.mxu0 %v611
    %822 = vmatprep.subr.bf16.mxu0 0
    %823 = vmatpush1.bf16.msra.mxu0 %v612
    %824 = vmatprep.subr.bf16.mxu0 0
    %825 = vmatpush1.bf16.msra.mxu0 %v613
    %826 = vmatprep.subr.bf16.mxu0 0
    %827 = vmatpush1.bf16.msra.mxu0 %v614
    %828 = vmatprep.subr.bf16.mxu0 0
    %829 = vmatpush1.bf16.msra.mxu0 %v615
    %830 = vmatprep.subr.bf16.mxu0 0
    %831 = vmatpush1.bf16.msra.mxu0 %v616
    %832 = vmatprep.subr.bf16.mxu0 0
    %833 = vmatpush1.bf16.msra.mxu0 %v617
    %834 = vmatprep.subr.bf16.mxu0 0
    %835 = vmatpush1.bf16.msra.mxu0 %v618
    %836 = vmatprep.subr.bf16.mxu0 0
    %837 = vmatpush1.bf16.msra.mxu0 %v619
    %838 = vmatprep.subr.bf16.mxu0 0
    %839 = vmatpush1.bf16.msra.mxu0 %v620
    %840 = vmatprep.mubr.bf16.mxu0 %v64
    %841 = vmatmul.mubr.bf16.gmra.mrb[0].mxu0 %v63
    %v842 = vpop.f32.mrb[0].mxu0
    %v843 = vadd.f32 %v802, %v842
    %v844 = vpop.f32.mrb[0].mxu0
    %v845 = vpop.f32.mrb[0].mxu0
    %v846 = vadd.f32 %v805, %v845
    %v847 = vpop.f32.mrb[0].mxu0
    %848 = vdwg.mxu0
    %v849 = vld [vmem:[%s4] sm:$0x1]
    %v851 = vlaneseq
    %v852 = vshrl.u32 %v851, 7
    %v853 = vsub.s32 0, %v852
    %v854 = vrot.slane %v849, %v853
    %v856 = vadd.f32 %v843, %v854
    %v857 = vadd.f32 %v846, %v854
    %v858 = vmax.f32 %v856, 0.0
    %v859 = vmax.f32 %v857, 0.0
    %v860 = vpack.c.bf16 %v859, %v858
    %v861 = vld [vmem:[%s5] sm:$0xf]
    %v862 = vld [vmem:[%s5 + $0x4] sm:$0xf]
    %v863 = vld [vmem:[%s5 + $0x8] sm:$0xf]
    %v864 = vld [vmem:[%s5 + $0xc] sm:$0xf]
    %v865 = vld [vmem:[%s5 + $0x10] sm:$0xf]
    %v866 = vld [vmem:[%s5 + $0x14] sm:$0xf]
    %v867 = vld [vmem:[%s5 + $0x18] sm:$0xf]
    %v868 = vld [vmem:[%s5 + $0x1c] sm:$0xf]
    %v869 = vld [vmem:[%s5 + $0x20] sm:$0xf]
    %v870 = vld [vmem:[%s5 + $0x24] sm:$0xf]
    %v871 = vld [vmem:[%s5 + $0x28] sm:$0xf]
    %v872 = vld [vmem:[%s5 + $0x2c] sm:$0xf]
    %v873 = vld [vmem:[%s5 + $0x30] sm:$0xf]
    %v874 = vld [vmem:[%s5 + $0x34] sm:$0xf]
    %v875 = vld [vmem:[%s5 + $0x38] sm:$0xf]
    %v876 = vld [vmem:[%s5 + $0x3c] sm:$0xf]
    %v877 = vld [vmem:[%s6] sm:$0x1]
    %v879 = vlaneseq
    %v880 = vshrl.u32 %v879, 7
    %v881 = vsub.s32 0, %v880
    %v882 = vrot.slane %v877, %v881
    %v900 = vunpack.c.l.b16 %v861
    %v901 = vunpack.c.l.b16 %v862
    %v902 = vunpack.c.l.b16 %v863
    %v903 = vunpack.c.l.b16 %v864
    %v904 = vunpack.c.l.b16 %v865
    %v905 = vunpack.c.l.b16 %v866
    %v906 = vunpack.c.l.b16 %v867
    %v907 = vunpack.c.l.b16 %v868
    %v908 = vunpack.c.l.b16 %v869
    %v909 = vunpack.c.l.b16 %v870
    %v910 = vunpack.c.l.b16 %v871
    %v911 = vunpack.c.l.b16 %v872
    %v912 = vunpack.c.l.b16 %v873
    %v913 = vunpack.c.l.b16 %v874
    %v914 = vunpack.c.l.b16 %v875
    %v915 = vunpack.c.l.b16 %v876
    %v916 = vpack.c.b16 %v901, %v900
    %v917 = vpack.c.b16 %v903, %v902
    %v918 = vpack.c.b16 %v905, %v904
    %v919 = vpack.c.b16 %v907, %v906
    %v920 = vpack.c.b16 %v909, %v908
    %v921 = vpack.c.b16 %v911, %v910
    %v922 = vpack.c.b16 %v913, %v912
    %v923 = vpack.c.b16 %v915, %v914
    %932 = vmatprep.subr.bf16.mxu0 0
    %933 = vmatpush1.bf16.msra.mxu0 %v916
    %934 = vmatprep.subr.bf16.mxu0 0
    %935 = vmatpush1.bf16.msra.mxu0 %v917
    %936 = vmatprep.subr.bf16.mxu0 0
    %937 = vmatpush1.bf16.msra.mxu0 %v918
    %938 = vmatprep.subr.bf16.mxu0 0
    %939 = vmatpush1.bf16.msra.mxu0 %v919
    %940 = vmatprep.subr.bf16.mxu0 0
    %941 = vmatpush1.bf16.msra.mxu0 %v920
    %942 = vmatprep.subr.bf16.mxu0 0
    %943 = vmatpush1.bf16.msra.mxu0 %v921
    %944 = vmatprep.subr.bf16.mxu0 0
    %945 = vmatpush1.bf16.msra.mxu0 %v922
    %946 = vmatprep.subr.bf16.mxu0 0
    %947 = vmatpush1.bf16.msra.mxu0 %v923
    %948 = vmatprep.subr.bf16.mxu0 0
    %949 = vmatpush1.bf16.msra.mxu0 0
    %950 = vmatprep.subr.bf16.mxu0 0
    %951 = vmatpush1.bf16.msra.mxu0 0
    %952 = vmatprep.subr.bf16.mxu0 0
    %953 = vmatpush1.bf16.msra.mxu0 0
    %954 = vmatprep.subr.bf16.mxu0 0
    %955 = vmatpush1.bf16.msra.mxu0 0
    %956 = vmatprep.subr.bf16.mxu0 0
    %957 = vmatpush1.bf16.msra.mxu0 0
    %958 = vmatprep.subr.bf16.mxu0 0
    %959 = vmatpush1.bf16.msra.mxu0 0
    %960 = vmatprep.subr.bf16.mxu0 0
    %961 = vmatpush1.bf16.msra.mxu0 0
    %962 = vmatprep.subr.bf16.mxu0 0
    %963 = vmatpush1.bf16.msra.mxu0 0
    %964 = vmatprep.mubr.bf16.mxu0 0
    %965 = vmatmul.mubr.bf16.gmra.mrb[0].mxu0 %v860
    %v966 = vpop.f32.mrb[0].mxu0
    %v967 = vadd.f32 %v882, %v966
    %v968 = vpop.f32.mrb[0].mxu0
    %v969 = vpop.f32.mrb[0].mxu0
    %v970 = vadd.f32 %v882, %v969
    %v971 = vpop.f32.mrb[0].mxu0
    %972 = vdwg.mxu0
    %v973 = vpack.c.bf16 %v970, %v967
    %v975 = vunpack.c.l.b16 %v973
    %v976 = vunpack.c.h.b16 %v973
    %v977 = vpack.c.b16 %v975, %v975
    %v978 = vpack.c.b16 %v976, %v976
    %981 = vst [vmem:[%s7] sm:$0xf] %v977
    %982 = vst [vmem:[%s7 + $0x4] sm:$0xf] %v978
    // Predicated region
    $region34: #{policy_fn.1} parent=1 // pred_check
      _
    $region35: #{policy_fn.1} parent=1 // pred_check_branch
      %984 = sbr.rel (0) target = $region37
    $region36: #{policy_fn.1} parent=1 // pred_region
      _
    $region37: #{policy_fn.1} parent=1 // pred_fallthru
      _
    // Predicated region
    $region38: #{policy_fn.1} parent=1 // pred_check
      _
    $region39: #{policy_fn.1} parent=1 // pred_check_branch
      %986 = sbr.rel (0) target = $region41
    $region40: #{policy_fn.1} parent=1 // pred_region
      _
    $region41: #{policy_fn.1} parent=1 // pred_fallthru
      _
    %987 = vsyncpa [#allocation3], 1

</llo_original>
